<compile_context>
chip_gen: v7x
topology: tpu7x:2x2x1
jax: 0.10.0
libtpu: 0.0.40
codegen_flags: <defaults>
</compile_context>

<pallas_src>
import jax
import jax.numpy as jnp
from jax.experimental import pallas as pl
from jax.experimental.pallas import tpu as pltpu

_LANE = 1024      # lane-dense last dim (multiple of 128)
_TILE_ROWS = 512  # 512 x 1024 x 4B = 2 MiB per f32 block


def _surrogate_fwd_kernel(x_ref, o_ref):
    # Heaviside step: spike = 1.0 where x >= 0 else 0.0
    o_ref[...] = (x_ref[...] >= 0).astype(o_ref.dtype)


def surrogate_forward(x, alpha=None):
    """x: float32 array of any shape (NCHW expected). alpha is unused in the
    forward pass (it only shapes the surrogate gradient in backward)."""
    del alpha  # gradient-shaping only; forward output is alpha-independent
    orig_shape = x.shape

    # Flatten fully and pad to a multiple of the lane-dense width.
    flat = x.reshape(-1)
    n = flat.shape[0]
    n_pad = pl.cdiv(n, _LANE) * _LANE
    if n_pad != n:
        flat = jnp.pad(flat, (0, n_pad - n))
    rows = n_pad // _LANE
    x2d = flat.reshape(rows, _LANE)

    # Tile rows: either a multiple of 8 (512) or the full row extent for
    # small inputs, satisfying the (8, 128) block constraint either way.
    tile_r = _TILE_ROWS if rows >= _TILE_ROWS else rows
    grid = (pl.cdiv(rows, tile_r),)

    out2d = pl.pallas_call(
        _surrogate_fwd_kernel,
        out_shape=jax.ShapeDtypeStruct((rows, _LANE), jnp.float32),
        grid=grid,
        in_specs=[pl.BlockSpec((tile_r, _LANE), lambda i: (i, 0))],
        out_specs=pl.BlockSpec((tile_r, _LANE), lambda i: (i, 0)),
        compiler_params=pltpu.CompilerParams(
            dimension_semantics=("parallel",)),
    )(x2d)

    out_flat = out2d.reshape(-1)
    if n_pad != n:
        out_flat = out_flat[:n]
    return out_flat.reshape(orig_shape)


if __name__ == "__main__":
    # Deterministic parameter init (module __init__: alpha scalar parameter).
    alpha = 2.0

    key = jax.random.PRNGKey(0)
    # Small NCHW input consistent with a membrane-potential tensor.
    x = jax.random.normal(key, (2, 4, 16, 16), dtype=jnp.float32)

    spikes = surrogate_forward(x, alpha)
    spikes = jax.block_until_ready(spikes)

    # Sanity check against plain-JAX reference.
    ref = (x >= 0).astype(jnp.float32)
    assert spikes.shape == x.shape
    assert spikes.dtype == jnp.float32
    assert bool(jnp.all(spikes == ref))

    print("KERNEL_OK")
</pallas_src>

<mosaic_0001>
module attributes {stable_mosaic.version = 11 : i64} {
  func.func @_surrogate_fwd_kernel(%arg0: i32, %arg1: memref<2x1024xf32, #tpu.memory_space<vmem>>, %arg2: memref<2x1024xf32, #tpu.memory_space<vmem>>) attributes {dimension_semantics = [#tpu.dimension_semantics<parallel>], iteration_bounds = array<i64: 1>, scalar_prefetch = 0 : i64, scratch_operands = 0 : i64, tpu.core_type = #tpu.core_type<tc>, window_params = [{transform_indices = @transform_0, window_bounds = array<i64: 2, 1024>}, {transform_indices = @transform_1, window_bounds = array<i64: 2, 1024>}]} {
    %c0 = arith.constant 0 : index
    %c0_0 = arith.constant 0 : index
    %0 = vector.load %arg1[%c0, %c0_0] : memref<2x1024xf32, #tpu.memory_space<vmem>>, vector<2x1024xf32>
    %cst = arith.constant 0.000000e+00 : f32
    %1 = vector.broadcast %cst : f32 to vector<2x1024xf32>
    %2 = arith.cmpf oge, %0, %1 : vector<2x1024xf32>
    %3 = arith.extui %2 : vector<2x1024xi1> to vector<2x1024xi32>
    %4 = arith.sitofp %3 : vector<2x1024xi32> to vector<2x1024xf32>
    %c0_1 = arith.constant 0 : index
    %c0_2 = arith.constant 0 : index
    %5 = vector.load %arg2[%c0_1, %c0_2] : memref<2x1024xf32, #tpu.memory_space<vmem>>, vector<2x1024xf32>
    tpu.vector_store %arg2[%c0_1, %c0_2], %4 {strides = array<i32>} : memref<2x1024xf32, #tpu.memory_space<vmem>>, vector<2x1024xf32>,
    return
  }
  func.func @transform_0(%arg0: i32) -> (i32, i32) {
    %c0_i32 = arith.constant 0 : i32
    %c0_i32_0 = arith.constant 0 : i32
    return %arg0, %c0_i32 : i32, i32
  }
  func.func @transform_1(%arg0: i32) -> (i32, i32) {
    %c0_i32 = arith.constant 0 : i32
    %c0_i32_0 = arith.constant 0 : i32
    return %arg0, %c0_i32 : i32, i32
  }
}

</mosaic_0001>

<llo_original>
// kernel: tpu_custom_call.1
$region0: #{tpu_custom_call.1}
  #allocation0 [shape = 'u32[]', space=smem, size = 0x4, offset = 0x4, fixed_abs, tag = 'smem constant byte address 0x4 - core index']
  #allocation1 [shape = 'u32[144,128]{1,0:T(1,128)}', space=vmem, size = 0x12000, scoped, tag = 'internal scratch']
  %s0 = inlined_call_operand.hbm [shape: f32[2,1024], index: 0, kind: input, shape index: {}]
  %s1 = inlined_call_operand.hbm [shape: f32[2,1024], index: 1, kind: output, shape index: {}]
  %s2 = sld [smem:[#allocation0]]
  $region18: #{tpu_custom_call.1} parent=0
    _
  %s4 = ssub.s32 1, %s2
  %s5 = scalar_select 0, %s4, %s2
  $region1: #{tpu_custom_call.1} parent=0
    #allocation2 [shape = 'u8[8192]{0}', space=vmem, size = 0x2000, scoped, tag = 'input window, operand 0, single buffered']
    #allocation3 [shape = 's32[1]{0}', space=sflag, size = 0x4, scoped, tag = 'scoped memory for tpu_custom_call.1']
    #allocation4 [shape = 's32[1]{0}', space=sflag, size = 0x4, scoped, tag = 'scoped memory for tpu_custom_call.1']
    #allocation5 [shape = 'u8[8192]{0}', space=vmem, size = 0x2000, scoped, tag = 'output window, operand 0, single buffered']
    %6 = vsyncpa [#allocation3], 0
    %7 = vsyncpa [#allocation4], 0
    // Predicated region
    $region2: #{tpu_custom_call.1} parent=1 // pred_check
      _
    $region3: #{tpu_custom_call.1} parent=1 // pred_check_branch
      %9 = sbr.rel (0) target = $region5
    $region4: #{tpu_custom_call.1} parent=1 // pred_region
      %s11 = ssub.s32 256, 256
      %12 = vsyncadd [#allocation3], %s11
      %s14 = sshll.u32 [#allocation2], 4
      %s15 = int_to_ptr.vmem [resolvable:$true] %s14
      %17 = dma.hbm_to_vmem [thread:$0]  %s0, 256, %s15, [#allocation3]
    $region5: #{tpu_custom_call.1} parent=1 // pred_fallthru
      _
    // Predicated region
    $region6: #{tpu_custom_call.1} parent=1 // pred_check
      _
    $region7: #{tpu_custom_call.1} parent=1 // pred_check_branch
      %19 = sbr.rel (0) target = $region9
    $region8: #{tpu_custom_call.1} parent=1 // pred_region
      %20 = dma.done [#allocation3], 256
    $region9: #{tpu_custom_call.1} parent=1 // pred_fallthru
      _
    %v21 = vld [vmem:[#allocation2] sm:$0xff]
    %v22 = vld [vmem:[#allocation2 + $0x8] sm:$0xff]
    %vm23 = vcmp.ge.f32.partialorder %v21, 0.0
    %vm24 = vcmp.ge.f32.partialorder %v22, 0.0
    %v25 = vsel %vm23, 1, 0
    %v26 = vsel %vm24, 1, 0
    %v27 = vcvt.s32.f32 %v25
    %v28 = vcvt.s32.f32 %v26
    %29 = vst [vmem:[#allocation5] sm:$0xff] %v27
    %30 = vst [vmem:[#allocation5 + $0x8] sm:$0xff] %v28
    // Predicated region
    $region10: #{tpu_custom_call.1} parent=1 // pred_check
      _
    $region11: #{tpu_custom_call.1} parent=1 // pred_check_branch
      %32 = sbr.rel (0) target = $region13
    $region12: #{tpu_custom_call.1} parent=1 // pred_region
      %s34 = ssub.s32 256, 256
      %35 = vsyncadd [#allocation4], %s34
      %s37 = sshll.u32 [#allocation5], 4
      %s38 = int_to_ptr.vmem [resolvable:$true] %s37
      %40 = dma.vmem_to_hbm [thread:$0]  %s38, 256, %s1, [#allocation4]
    $region13: #{tpu_custom_call.1} parent=1 // pred_fallthru
      _
    // Predicated region
    $region14: #{tpu_custom_call.1} parent=1 // pred_check
      _
    $region15: #{tpu_custom_call.1} parent=1 // pred_check_branch
      %42 = sbr.rel (0) target = $region17
    $region16: #{tpu_custom_call.1} parent=1 // pred_region
      %43 = dma.done [#allocation4], 256
    $region17: #{tpu_custom_call.1} parent=1 // pred_fallthru
      _
    %44 = vsyncpa [#allocation3], 1
    %45 = vsyncpa [#allocation4], 1

</llo_original>
